<compile_context>
chip_gen: v6e
topology: v6e:2x2x1
jax: 0.10.0
libtpu: 0.0.40
codegen_flags: <defaults>
</compile_context>

<pallas_src>
import jax
import jax.numpy as jnp
from jax.experimental import pallas as pl
from jax.experimental.pallas import tpu as pltpu


def _round_up(x, m):
    return ((x + m - 1) // m) * m


# ----------------------------- Pallas kernel --------------------------------

def dnn1_kernel(x_ref, w1_ref, b1_ref, w2_ref, b2_ref,
                w3_ref, b3_ref, w4_ref, b4_ref, o_ref):
    # x_ref: (TILE_B, F)   wN_ref: (in, out)   bN_ref: (1, out)
    # o_ref: (TILE_B, pred_len)
    h = jnp.dot(x_ref[...], w1_ref[...],
                preferred_element_type=jnp.float32) + b1_ref[...]
    h = jnp.maximum(h, 0.0)                                        # relu(fc1)
    h = jnp.dot(h.astype(w2_ref.dtype), w2_ref[...],
                preferred_element_type=jnp.float32) + b2_ref[...]
    h = jnp.maximum(h, 0.0)                                        # relu(fc2)
    h = jnp.dot(h.astype(w3_ref.dtype), w3_ref[...],
                preferred_element_type=jnp.float32) + b3_ref[...]
    h = jnp.maximum(h, 0.0)                                        # relu(fc3)
    o_ref[...] = (jnp.dot(h.astype(w4_ref.dtype), w4_ref[...],
                          preferred_element_type=jnp.float32)
                  + b4_ref[...]).astype(o_ref.dtype)               # fc4


# ---------------------------- Python wrappers --------------------------------

def prepare_params(torch_style_params, compute_dtype=jnp.float32):
    """One-time preprocessing (hoisted out of the forward):
    transpose PyTorch (out,in) weights to (in,out), reshape biases to (1,out).
    Weights may optionally be cast to bf16 (biases / accumulation stay f32)."""
    p = {}
    for i in (1, 2, 3, 4):
        w = torch_style_params[f"fc{i}_w"]
        b = torch_style_params[f"fc{i}_b"]
        p[f"fc{i}_w"] = jnp.asarray(w, jnp.float32).T.astype(compute_dtype)
        p[f"fc{i}_b"] = jnp.asarray(b, jnp.float32).reshape(1, -1)
    return p


def dnn1_forward(prepared, x, input_size, hist_len, tile_b=4096):
    """Fused forward. x: any shape reshapeable to (-1, input_size*hist_len)."""
    F = input_size * hist_len
    w1, b1 = prepared["fc1_w"], prepared["fc1_b"]
    w2, b2 = prepared["fc2_w"], prepared["fc2_b"]
    w3, b3 = prepared["fc3_w"], prepared["fc3_b"]
    w4, b4 = prepared["fc4_w"], prepared["fc4_b"]
    assert w1.shape[0] == F, (w1.shape, F)
    P = w4.shape[1]

    # Original module semantics: cast to f32 then reshape; optionally drop to
    # the (bf16) compute dtype for the HBM-bound x read.
    x = jnp.asarray(x, jnp.float32).reshape(-1, F).astype(w1.dtype)
    B = x.shape[0]

    # Batch tiling: tile must be a multiple of 8 (sublane) or the full extent.
    tile = _round_up(min(tile_b, _round_up(B, 8)), 8)
    B_pad = _round_up(B, tile)
    if B_pad != B:
        x = jnp.pad(x, ((0, B_pad - B), (0, 0)))
    grid = (B_pad // tile,)

    def resident(arr):   # weights/biases: DMA'd once, VMEM-resident all steps
        return pl.BlockSpec(arr.shape, lambda i: (0, 0))

    x_spec = pl.BlockSpec((tile, F), lambda i: (i, 0))
    o_spec = pl.BlockSpec((tile, P), lambda i: (i, 0))

    # Advisory cost estimate for XLA scheduling around the custom call.
    H1, H2, H3 = w1.shape[1], w2.shape[1], w3.shape[1]
    flops = 2 * B_pad * (F * H1 + H1 * H2 + H2 * H3 + H3 * P)
    param_bytes = sum(int(v.size) * v.dtype.itemsize for v in prepared.values())
    bytes_accessed = (B_pad * F * x.dtype.itemsize + B_pad * P * 4 + param_bytes)
    cost = pl.CostEstimate(flops=int(flops), transcendentals=0,
                           bytes_accessed=int(bytes_accessed))

    out = pl.pallas_call(
        dnn1_kernel,
        out_shape=jax.ShapeDtypeStruct((B_pad, P), jnp.float32),
        grid=grid,
        in_specs=[x_spec,
                  resident(w1), resident(b1),
                  resident(w2), resident(b2),
                  resident(w3), resident(b3),
                  resident(w4), resident(b4)],
        out_specs=o_spec,
        compiler_params=pltpu.CompilerParams(
            dimension_semantics=("parallel",),       # shards rows across v7x TCs
            vmem_limit_bytes=32 * 1024 * 1024,       # > v5e's 16 MiB default
        ),
        cost_estimate=cost,
    )(x, w1, b1, w2, b2, w3, b3, w4, b4)

    return out[:B] if B_pad != B else out


# ------------------------------ Pure-JAX ref ----------------------------------

def dnn1_ref(torch_params, x, input_size, hist_len):
    hp = jax.lax.Precision.HIGHEST   # match the kernel's f32-accurate matmuls
    x = jnp.asarray(x, jnp.float32).reshape(-1, input_size * hist_len)
    h = jax.nn.relu(jnp.dot(x, torch_params["fc1_w"].T, precision=hp) + torch_params["fc1_b"])
    h = jax.nn.relu(jnp.dot(h, torch_params["fc2_w"].T, precision=hp) + torch_params["fc2_b"])
    h = jax.nn.relu(jnp.dot(h, torch_params["fc3_w"].T, precision=hp) + torch_params["fc3_b"])
    return jnp.dot(h, torch_params["fc4_w"].T, precision=hp) + torch_params["fc4_b"]


# --------------------------------- Main ---------------------------------------

if __name__ == "__main__":
    hist_len, pred_len, input_size, hidden_size = 8, 8, 4, 32
    batch = 2
    # num_layers / device are unused by DNN1.forward.

    key = jax.random.PRNGKey(0)
    ks = jax.random.split(key, 10)

    def init(k, shape, scale=0.1):
        return (scale * jax.random.normal(k, shape)).astype(jnp.float32)

    # PyTorch nn.Linear layout: weight (out_features, in_features), bias (out_features,)
    torch_params = {
        "fc1_w": init(ks[0], (hidden_size, input_size * hist_len)),
        "fc1_b": init(ks[1], (hidden_size,)),
        "fc2_w": init(ks[2], (hidden_size, hidden_size)),
        "fc2_b": init(ks[3], (hidden_size,)),
        "fc3_w": init(ks[4], (hidden_size, hidden_size)),
        "fc3_b": init(ks[5], (hidden_size,)),
        "fc4_w": init(ks[6], (pred_len, hidden_size)),
        "fc4_b": init(ks[7], (pred_len,)),
    }

    prepared = prepare_params(torch_params)   # one-time; not per forward

    # 1) Tiny demo batch, as the PyTorch module would receive it.
    x_small = jax.random.normal(ks[8], (batch, hist_len, input_size), dtype=jnp.float32)
    out = jax.block_until_ready(dnn1_forward(prepared, x_small, input_size, hist_len))
    assert out.shape == (batch, pred_len), out.shape
    ref = dnn1_ref(torch_params, x_small, input_size, hist_len)
    assert jnp.allclose(out, ref, atol=1e-4, rtol=1e-4), float(jnp.max(jnp.abs(out - ref)))

    # 2) Larger batch exercising the multi-step grid with VMEM-resident weights.
    big = 2048
    x_big = jax.random.normal(ks[9], (big, hist_len, input_size), dtype=jnp.float32)
    out_big = jax.block_until_ready(
        dnn1_forward(prepared, x_big, input_size, hist_len, tile_b=512))
    assert out_big.shape == (big, pred_len), out_big.shape
    ref_big = dnn1_ref(torch_params, x_big, input_size, hist_len)
    assert jnp.allclose(out_big, ref_big, atol=1e-4, rtol=1e-4), \
        float(jnp.max(jnp.abs(out_big - ref_big)))

    print("KERNEL_OK")
</pallas_src>

<mosaic_0001>
module attributes {stable_mosaic.version = 11 : i64} {
  func.func @dnn1_kernel(%arg0: i32, %arg1: memref<8x32xf32, #tpu.memory_space<vmem>>, %arg2: memref<32x32xf32, #tpu.memory_space<vmem>>, %arg3: memref<1x32xf32, #tpu.memory_space<vmem>>, %arg4: memref<32x32xf32, #tpu.memory_space<vmem>>, %arg5: memref<1x32xf32, #tpu.memory_space<vmem>>, %arg6: memref<32x32xf32, #tpu.memory_space<vmem>>, %arg7: memref<1x32xf32, #tpu.memory_space<vmem>>, %arg8: memref<32x8xf32, #tpu.memory_space<vmem>>, %arg9: memref<1x8xf32, #tpu.memory_space<vmem>>, %arg10: memref<8x8xf32, #tpu.memory_space<vmem>>) attributes {dimension_semantics = [#tpu.dimension_semantics<parallel>], iteration_bounds = array<i64: 1>, scalar_prefetch = 0 : i64, scratch_operands = 0 : i64, tpu.core_type = #tpu.core_type<tc>, window_params = [{transform_indices = @transform_0, window_bounds = array<i64: 8, 32>}, {pipeline_mode = #tpu.pipeline_mode<synchronous>, transform_indices = @transform_1, window_bounds = array<i64: 32, 32>}, {pipeline_mode = #tpu.pipeline_mode<synchronous>, transform_indices = @transform_2, window_bounds = array<i64: 1, 32>}, {pipeline_mode = #tpu.pipeline_mode<synchronous>, transform_indices = @transform_3, window_bounds = array<i64: 32, 32>}, {pipeline_mode = #tpu.pipeline_mode<synchronous>, transform_indices = @transform_4, window_bounds = array<i64: 1, 32>}, {pipeline_mode = #tpu.pipeline_mode<synchronous>, transform_indices = @transform_5, window_bounds = array<i64: 32, 32>}, {pipeline_mode = #tpu.pipeline_mode<synchronous>, transform_indices = @transform_6, window_bounds = array<i64: 1, 32>}, {pipeline_mode = #tpu.pipeline_mode<synchronous>, transform_indices = @transform_7, window_bounds = array<i64: 32, 8>}, {pipeline_mode = #tpu.pipeline_mode<synchronous>, transform_indices = @transform_8, window_bounds = array<i64: 1, 8>}, {transform_indices = @transform_9, window_bounds = array<i64: 8, 8>}]} {
    %c0 = arith.constant 0 : index
    %c0_0 = arith.constant 0 : index
    %0 = vector.load %arg1[%c0, %c0_0] : memref<8x32xf32, #tpu.memory_space<vmem>>, vector<8x32xf32>
    %c0_1 = arith.constant 0 : index
    %c0_2 = arith.constant 0 : index
    %1 = vector.load %arg2[%c0_1, %c0_2] : memref<32x32xf32, #tpu.memory_space<vmem>>, vector<32x32xf32>
    %cst = arith.constant dense<0.000000e+00> : vector<8x32xf32>
    %2 = tpu.matmul %0, %1, %cst {dimension_numbers = #tpu.dot_dimension_numbers<[1], [0], [0], [1], [0, 0, 1, 1], [], []>} : vector<8x32xf32>, vector<32x32xf32>, vector<8x32xf32> -> vector<8x32xf32>
    %c0_3 = arith.constant 0 : index
    %c0_4 = arith.constant 0 : index
    %3 = vector.load %arg3[%c0_3, %c0_4] : memref<1x32xf32, #tpu.memory_space<vmem>>, vector<1x32xf32>
    %4 = vector.broadcast %3 : vector<1x32xf32> to vector<8x32xf32>
    %5 = arith.addf %2, %4 : vector<8x32xf32>
    %cst_5 = arith.constant 0.000000e+00 : f32
    %6 = vector.broadcast %cst_5 : f32 to vector<8x32xf32>
    %7 = arith.maximumf %5, %6 : vector<8x32xf32>
    %c0_6 = arith.constant 0 : index
    %c0_7 = arith.constant 0 : index
    %8 = vector.load %arg4[%c0_6, %c0_7] : memref<32x32xf32, #tpu.memory_space<vmem>>, vector<32x32xf32>
    %cst_8 = arith.constant dense<0.000000e+00> : vector<8x32xf32>
    %9 = tpu.matmul %7, %8, %cst_8 {dimension_numbers = #tpu.dot_dimension_numbers<[1], [0], [0], [1], [0, 0, 1, 1], [], []>} : vector<8x32xf32>, vector<32x32xf32>, vector<8x32xf32> -> vector<8x32xf32>
    %c0_9 = arith.constant 0 : index
    %c0_10 = arith.constant 0 : index
    %10 = vector.load %arg5[%c0_9, %c0_10] : memref<1x32xf32, #tpu.memory_space<vmem>>, vector<1x32xf32>
    %11 = vector.broadcast %10 : vector<1x32xf32> to vector<8x32xf32>
    %12 = arith.addf %9, %11 : vector<8x32xf32>
    %cst_11 = arith.constant 0.000000e+00 : f32
    %13 = vector.broadcast %cst_11 : f32 to vector<8x32xf32>
    %14 = arith.maximumf %12, %13 : vector<8x32xf32>
    %c0_12 = arith.constant 0 : index
    %c0_13 = arith.constant 0 : index
    %15 = vector.load %arg6[%c0_12, %c0_13] : memref<32x32xf32, #tpu.memory_space<vmem>>, vector<32x32xf32>
    %cst_14 = arith.constant dense<0.000000e+00> : vector<8x32xf32>
    %16 = tpu.matmul %14, %15, %cst_14 {dimension_numbers = #tpu.dot_dimension_numbers<[1], [0], [0], [1], [0, 0, 1, 1], [], []>} : vector<8x32xf32>, vector<32x32xf32>, vector<8x32xf32> -> vector<8x32xf32>
    %c0_15 = arith.constant 0 : index
    %c0_16 = arith.constant 0 : index
    %17 = vector.load %arg7[%c0_15, %c0_16] : memref<1x32xf32, #tpu.memory_space<vmem>>, vector<1x32xf32>
    %18 = vector.broadcast %17 : vector<1x32xf32> to vector<8x32xf32>
    %19 = arith.addf %16, %18 : vector<8x32xf32>
    %cst_17 = arith.constant 0.000000e+00 : f32
    %20 = vector.broadcast %cst_17 : f32 to vector<8x32xf32>
    %21 = arith.maximumf %19, %20 : vector<8x32xf32>
    %c0_18 = arith.constant 0 : index
    %c0_19 = arith.constant 0 : index
    %22 = vector.load %arg8[%c0_18, %c0_19] : memref<32x8xf32, #tpu.memory_space<vmem>>, vector<32x8xf32>
    %cst_20 = arith.constant dense<0.000000e+00> : vector<8x8xf32>
    %23 = tpu.matmul %21, %22, %cst_20 {dimension_numbers = #tpu.dot_dimension_numbers<[1], [0], [0], [1], [0, 0, 1, 1], [], []>} : vector<8x32xf32>, vector<32x8xf32>, vector<8x8xf32> -> vector<8x8xf32>
    %c0_21 = arith.constant 0 : index
    %c0_22 = arith.constant 0 : index
    %24 = vector.load %arg9[%c0_21, %c0_22] : memref<1x8xf32, #tpu.memory_space<vmem>>, vector<1x8xf32>
    %25 = vector.broadcast %24 : vector<1x8xf32> to vector<8x8xf32>
    %26 = arith.addf %23, %25 : vector<8x8xf32>
    %c0_23 = arith.constant 0 : index
    %c0_24 = arith.constant 0 : index
    %27 = vector.load %arg10[%c0_23, %c0_24] : memref<8x8xf32, #tpu.memory_space<vmem>>, vector<8x8xf32>
    tpu.vector_store %arg10[%c0_23, %c0_24], %26 {strides = array<i32>} : memref<8x8xf32, #tpu.memory_space<vmem>>, vector<8x8xf32>,
    return
  }
  func.func @transform_0(%arg0: i32) -> (i32, i32) {
    %c0_i32 = arith.constant 0 : i32
    %c0_i32_0 = arith.constant 0 : i32
    return %arg0, %c0_i32 : i32, i32
  }
  func.func @transform_1(%arg0: i32) -> (i32, i32) {
    %c0_i32 = arith.constant 0 : i32
    %c0_i32_0 = arith.constant 0 : i32
    %c0_i32_1 = arith.constant 0 : i32
    return %c0_i32, %c0_i32_0 : i32, i32
  }
  func.func @transform_2(%arg0: i32) -> (i32, i32) {
    %c0_i32 = arith.constant 0 : i32
    %c0_i32_0 = arith.constant 0 : i32
    %c0_i32_1 = arith.constant 0 : i32
    return %c0_i32, %c0_i32_0 : i32, i32
  }
  func.func @transform_3(%arg0: i32) -> (i32, i32) {
    %c0_i32 = arith.constant 0 : i32
    %c0_i32_0 = arith.constant 0 : i32
    %c0_i32_1 = arith.constant 0 : i32
    return %c0_i32, %c0_i32_0 : i32, i32
  }
  func.func @transform_4(%arg0: i32) -> (i32, i32) {
    %c0_i32 = arith.constant 0 : i32
    %c0_i32_0 = arith.constant 0 : i32
    %c0_i32_1 = arith.constant 0 : i32
    return %c0_i32, %c0_i32_0 : i32, i32
  }
  func.func @transform_5(%arg0: i32) -> (i32, i32) {
    %c0_i32 = arith.constant 0 : i32
    %c0_i32_0 = arith.constant 0 : i32
    %c0_i32_1 = arith.constant 0 : i32
    return %c0_i32, %c0_i32_0 : i32, i32
  }
  func.func @transform_6(%arg0: i32) -> (i32, i32) {
    %c0_i32 = arith.constant 0 : i32
    %c0_i32_0 = arith.constant 0 : i32
    %c0_i32_1 = arith.constant 0 : i32
    return %c0_i32, %c0_i32_0 : i32, i32
  }
  func.func @transform_7(%arg0: i32) -> (i32, i32) {
    %c0_i32 = arith.constant 0 : i32
    %c0_i32_0 = arith.constant 0 : i32
    %c0_i32_1 = arith.constant 0 : i32
    return %c0_i32, %c0_i32_0 : i32, i32
  }
  func.func @transform_8(%arg0: i32) -> (i32, i32) {
    %c0_i32 = arith.constant 0 : i32
    %c0_i32_0 = arith.constant 0 : i32
    %c0_i32_1 = arith.constant 0 : i32
    return %c0_i32, %c0_i32_0 : i32, i32
  }
  func.func @transform_9(%arg0: i32) -> (i32, i32) {
    %c0_i32 = arith.constant 0 : i32
    %c0_i32_0 = arith.constant 0 : i32
    return %arg0, %c0_i32 : i32, i32
  }
}

</mosaic_0001>

<llo_original>
// kernel: tpu_custom_call.1
$region0: #{tpu_custom_call.1}
  #allocation0 [shape = 'u32[]', space=smem, size = 0x4, offset = 0x4, fixed_abs, tag = 'smem constant byte address 0x4 - core index']
  #allocation1 [shape = 'u32[144,128]{1,0:T(1,128)}', space=vmem, size = 0x12000, scoped, tag = 'internal scratch']
  %s0 = inlined_call_operand.vmem [shape: f32[8,32], index: 0, kind: input, shape index: {}]
  %s1 = inlined_call_operand.vmem [shape: f32[32,32], index: 1, kind: input, shape index: {}]
  %s2 = inlined_call_operand.vmem [shape: f32[1,32], index: 2, kind: input, shape index: {}]
  %s3 = inlined_call_operand.hbm [shape: f32[32,32], index: 3, kind: input, shape index: {}]
  %s4 = inlined_call_operand.vmem [shape: f32[1,32], index: 4, kind: input, shape index: {}]
  %s5 = inlined_call_operand.hbm [shape: f32[32,32], index: 5, kind: input, shape index: {}]
  %s6 = inlined_call_operand.vmem [shape: f32[1,32], index: 6, kind: input, shape index: {}]
  %s7 = inlined_call_operand.vmem [shape: f32[32,8], index: 7, kind: input, shape index: {}]
  %s8 = inlined_call_operand.vmem [shape: f32[1,8], index: 8, kind: input, shape index: {}]
  %s9 = inlined_call_operand.hbm [shape: f32[8,8], index: 9, kind: output, shape index: {}]
  %s10 = sld [smem:[#allocation0]]
  $region54: #{tpu_custom_call.1} parent=0
    _
  %s12 = ssub.s32 1, %s10
  %s13 = scalar_select 0, %s12, %s10
  $region1: #{tpu_custom_call.1} parent=0
    #allocation2 [shape = 'u8[16384]{0}', space=vmem, size = 0x4000, scoped, tag = 'input window, operand 3, single buffered']
    #allocation3 [shape = 's32[1]{0}', space=sflag, size = 0x4, scoped, tag = 'scoped memory for tpu_custom_call.1']
    #allocation4 [shape = 's32[1]{0}', space=sflag, size = 0x4, scoped, tag = 'scoped memory for tpu_custom_call.1']
    #allocation5 [shape = 'u8[16384]{0}', space=vmem, size = 0x4000, scoped, tag = 'input window, operand 5, single buffered']
    #allocation6 [shape = 's32[1]{0}', space=sflag, size = 0x4, scoped, tag = 'scoped memory for tpu_custom_call.1']
    #allocation7 [shape = 'u8[4096]{0}', space=vmem, size = 0x1000, scoped, tag = 'output window, operand 0, single buffered']
    %14 = vsyncpa [#allocation3], 0
    %15 = vsyncpa [#allocation6], 0
    %16 = vsyncpa [#allocation4], 0
    // Predicated region
    $region2: #{tpu_custom_call.1} parent=1 // pred_check
      _
    $region3: #{tpu_custom_call.1} parent=1 // pred_check_branch
      %18 = sbr.rel (0) target = $region5
    $region4: #{tpu_custom_call.1} parent=1 // pred_region
      _
    $region5: #{tpu_custom_call.1} parent=1 // pred_fallthru
      _
    // Predicated region
    $region6: #{tpu_custom_call.1} parent=1 // pred_check
      _
    $region7: #{tpu_custom_call.1} parent=1 // pred_check_branch
      %20 = sbr.rel (0) target = $region9
    $region8: #{tpu_custom_call.1} parent=1 // pred_region
      _
    $region9: #{tpu_custom_call.1} parent=1 // pred_fallthru
      _
    // Predicated region
    $region10: #{tpu_custom_call.1} parent=1 // pred_check
      _
    $region11: #{tpu_custom_call.1} parent=1 // pred_check_branch
      %22 = sbr.rel (0) target = $region13
    $region12: #{tpu_custom_call.1} parent=1 // pred_region
      _
    $region13: #{tpu_custom_call.1} parent=1 // pred_fallthru
      _
    // Predicated region
    $region14: #{tpu_custom_call.1} parent=1 // pred_check
      _
    $region15: #{tpu_custom_call.1} parent=1 // pred_check_branch
      %24 = sbr.rel (0) target = $region17
    $region16: #{tpu_custom_call.1} parent=1 // pred_region
      %s26 = ssub.s32 512, 512
      %27 = vsyncadd [#allocation3], %s26
      %s28 = sshll.u32 [#allocation2], 4
      %s29 = int_to_ptr.vmem [resolvable:$true] %s28
      %34 = dma.hbm_to_vmem [thread:$0]  %s3, 512, %s29, [#allocation3], 128, 128, 8
    $region17: #{tpu_custom_call.1} parent=1 // pred_fallthru
      _
    // Predicated region
    $region18: #{tpu_custom_call.1} parent=1 // pred_check
      _
    $region19: #{tpu_custom_call.1} parent=1 // pred_check_branch
      %36 = sbr.rel (0) target = $region21
    $region20: #{tpu_custom_call.1} parent=1 // pred_region
      _
    $region21: #{tpu_custom_call.1} parent=1 // pred_fallthru
      _
    // Predicated region
    $region22: #{tpu_custom_call.1} parent=1 // pred_check
      _
    $region23: #{tpu_custom_call.1} parent=1 // pred_check_branch
      %38 = sbr.rel (0) target = $region25
    $region24: #{tpu_custom_call.1} parent=1 // pred_region
      %s40 = ssub.s32 512, 512
      %41 = vsyncadd [#allocation6], %s40
      %s42 = sshll.u32 [#allocation5], 4
      %s43 = int_to_ptr.vmem [resolvable:$true] %s42
      %48 = dma.hbm_to_vmem [thread:$0]  %s5, 512, %s43, [#allocation6], 128, 128, 8
    $region25: #{tpu_custom_call.1} parent=1 // pred_fallthru
      _
    // Predicated region
    $region26: #{tpu_custom_call.1} parent=1 // pred_check
      _
    $region27: #{tpu_custom_call.1} parent=1 // pred_check_branch
      %50 = sbr.rel (0) target = $region29
    $region28: #{tpu_custom_call.1} parent=1 // pred_region
      _
    $region29: #{tpu_custom_call.1} parent=1 // pred_fallthru
      _
    // Predicated region
    $region30: #{tpu_custom_call.1} parent=1 // pred_check
      _
    $region31: #{tpu_custom_call.1} parent=1 // pred_check_branch
      %52 = sbr.rel (0) target = $region33
    $region32: #{tpu_custom_call.1} parent=1 // pred_region
      _
    $region33: #{tpu_custom_call.1} parent=1 // pred_fallthru
      _
    // Predicated region
    $region34: #{tpu_custom_call.1} parent=1 // pred_check
      _
    $region35: #{tpu_custom_call.1} parent=1 // pred_check_branch
      %54 = sbr.rel (0) target = $region37
    $region36: #{tpu_custom_call.1} parent=1 // pred_region
      _
    $region37: #{tpu_custom_call.1} parent=1 // pred_fallthru
      _
    // Predicated region
    $region38: #{tpu_custom_call.1} parent=1 // pred_check
      _
    $region39: #{tpu_custom_call.1} parent=1 // pred_check_branch
      %56 = sbr.rel (0) target = $region41
    $region40: #{tpu_custom_call.1} parent=1 // pred_region
      %57 = dma.done [#allocation3], 512
    $region41: #{tpu_custom_call.1} parent=1 // pred_fallthru
      _
    // Predicated region
    $region42: #{tpu_custom_call.1} parent=1 // pred_check
      _
    $region43: #{tpu_custom_call.1} parent=1 // pred_check_branch
      %59 = sbr.rel (0) target = $region45
    $region44: #{tpu_custom_call.1} parent=1 // pred_region
      %60 = dma.done [#allocation6], 512
    $region45: #{tpu_custom_call.1} parent=1 // pred_fallthru
      _
    %v61 = vld [vmem:[%s0] sm:$0xff]
    %v62 = vld [vmem:[%s1] sm:$0xff]
    %v63 = vld [vmem:[%s1 + $0x8] sm:$0xff]
    %v64 = vld [vmem:[%s1 + $0x10] sm:$0xff]
    %v65 = vld [vmem:[%s1 + $0x18] sm:$0xff]
    %v66 = vld [vmem:[%s2] sm:$0x1]
    %v68 = vlaneseq
    %v69 = vshrl.u32 %v68, 7
    %v70 = vsub.s32 0, %v69
    %v71 = vrot.slane %v66, %v70
    %vm73 = vcmask 261120
    %v75 = vsel %vm73, %v61, 0
    %77 = vmatprep.subr.mxu0 0.0
    %78 = vmatpush1.msra.mxu0 0.0
    %79 = vmatprep.subr.mxu0 0.0
    %80 = vmatpush1.msra.mxu0 0.0
    %81 = vmatprep.subr.mxu0 0.0
    %82 = vmatpush1.msra.mxu0 0.0
    %83 = vmatprep.subr.mxu0 0.0
    %84 = vmatpush1.msra.mxu0 0.0
    %85 = vmatprep.subr.mxu0 0.0
    %86 = vmatpush1.msra.mxu0 0.0
    %87 = vmatprep.subr.mxu0 0.0
    %88 = vmatpush1.msra.mxu0 0.0
    %89 = vmatprep.subr.mxu0 0.0
    %90 = vmatpush1.msra.mxu0 0.0
    %91 = vmatprep.subr.mxu0 0.0
    %92 = vmatpush1.msra.mxu0 0.0
    %93 = vmatprep.subr.mxu0 0.0
    %94 = vmatpush1.msra.mxu0 0.0
    %95 = vmatprep.subr.mxu0 0.0
    %96 = vmatpush1.msra.mxu0 0.0
    %97 = vmatprep.subr.mxu0 0.0
    %98 = vmatpush1.msra.mxu0 0.0
    %99 = vmatprep.subr.mxu0 0.0
    %100 = vmatpush1.msra.mxu0 0.0
    %101 = vmatprep.subr.mxu0 0.0
    %102 = vmatpush1.msra.mxu0 %v65
    %103 = vmatprep.subr.mxu0 0.0
    %104 = vmatpush1.msra.mxu0 %v64
    %105 = vmatprep.subr.mxu0 0.0
    %106 = vmatpush1.msra.mxu0 %v63
    %107 = vmatprep.subr.mxu0 0.0
    %108 = vmatpush1.msra.mxu0 %v62
    %109 = vmatprep.subr.mxu0 0.0
    %110 = vmatpush2.msra.mxu0 0.0
    %111 = vmatprep.subr.mxu0 0.0
    %112 = vmatpush2.msra.mxu0 0.0
    %113 = vmatprep.subr.mxu0 0.0
    %114 = vmatpush2.msra.mxu0 0.0
    %115 = vmatprep.subr.mxu0 0.0
    %116 = vmatpush2.msra.mxu0 0.0
    %117 = vmatprep.subr.mxu0 0.0
    %118 = vmatpush2.msra.mxu0 0.0
    %119 = vmatprep.subr.mxu0 0.0
    %120 = vmatpush2.msra.mxu0 0.0
    %121 = vmatprep.subr.mxu0 0.0
    %122 = vmatpush2.msra.mxu0 0.0
    %123 = vmatprep.subr.mxu0 0.0
    %124 = vmatpush2.msra.mxu0 0.0
    %125 = vmatprep.subr.mxu0 0.0
    %126 = vmatpush2.msra.mxu0 0.0
    %127 = vmatprep.subr.mxu0 0.0
    %128 = vmatpush2.msra.mxu0 0.0
    %129 = vmatprep.subr.mxu0 0.0
    %130 = vmatpush2.msra.mxu0 0.0
    %131 = vmatprep.subr.mxu0 0.0
    %132 = vmatpush2.msra.mxu0 0.0
    %133 = vmatprep.subr.mxu0 0.0
    %134 = vmatpush2.msra.mxu0 0.0
    %135 = vmatprep.subr.mxu0 0.0
    %136 = vmatpush2.msra.mxu0 0.0
    %137 = vmatprep.subr.mxu0 0.0
    %138 = vmatpush2.msra.mxu0 0.0
    %139 = vmatprep.subr.mxu0 0.0
    %140 = vmatpush2.msra.mxu0 0.0
    %141 = vmatprep.mubr.f32.mxu0 0.0
    %142 = vmatmul.mubr.f32.gmra.mxu0 %v75
    %v143 = vpop.f32.mrf.mxu0
    %v144 = vadd.f32 %v71, %v143
    %v145 = vpop.f32.mrf.mxu0
    %146 = vdwg.mxu0
    %v147 = vmax.f32 %v144, 0.0
    %v148 = vld [vmem:[#allocation2] sm:$0xff]
    %v149 = vld [vmem:[#allocation2 + $0x8] sm:$0xff]
    %v150 = vld [vmem:[#allocation2 + $0x10] sm:$0xff]
    %v151 = vld [vmem:[#allocation2 + $0x18] sm:$0xff]
    %v152 = vld [vmem:[%s4] sm:$0x1]
    %v154 = vlaneseq
    %v155 = vshrl.u32 %v154, 7
    %v156 = vsub.s32 0, %v155
    %v157 = vrot.slane %v152, %v156
    %v160 = vsel %vm73, %v147, 0
    %162 = vmatprep.subr.mxu0 0.0
    %163 = vmatpush1.msra.mxu0 0.0
    %164 = vmatprep.subr.mxu0 0.0
    %165 = vmatpush1.msra.mxu0 0.0
    %166 = vmatprep.subr.mxu0 0.0
    %167 = vmatpush1.msra.mxu0 0.0
    %168 = vmatprep.subr.mxu0 0.0
    %169 = vmatpush1.msra.mxu0 0.0
    %170 = vmatprep.subr.mxu0 0.0
    %171 = vmatpush1.msra.mxu0 0.0
    %172 = vmatprep.subr.mxu0 0.0
    %173 = vmatpush1.msra.mxu0 0.0
    %174 = vmatprep.subr.mxu0 0.0
    %175 = vmatpush1.msra.mxu0 0.0
    %176 = vmatprep.subr.mxu0 0.0
    %177 = vmatpush1.msra.mxu0 0.0
    %178 = vmatprep.subr.mxu0 0.0
    %179 = vmatpush1.msra.mxu0 0.0
    %180 = vmatprep.subr.mxu0 0.0
    %181 = vmatpush1.msra.mxu0 0.0
    %182 = vmatprep.subr.mxu0 0.0
    %183 = vmatpush1.msra.mxu0 0.0
    %184 = vmatprep.subr.mxu0 0.0
    %185 = vmatpush1.msra.mxu0 0.0
    %186 = vmatprep.subr.mxu0 0.0
    %187 = vmatpush1.msra.mxu0 %v151
    %188 = vmatprep.subr.mxu0 0.0
    %189 = vmatpush1.msra.mxu0 %v150
    %190 = vmatprep.subr.mxu0 0.0
    %191 = vmatpush1.msra.mxu0 %v149
    %192 = vmatprep.subr.mxu0 0.0
    %193 = vmatpush1.msra.mxu0 %v148
    %194 = vmatprep.subr.mxu0 0.0
    %195 = vmatpush2.msra.mxu0 0.0
    %196 = vmatprep.subr.mxu0 0.0
    %197 = vmatpush2.msra.mxu0 0.0
    %198 = vmatprep.subr.mxu0 0.0
    %199 = vmatpush2.msra.mxu0 0.0
    %200 = vmatprep.subr.mxu0 0.0
    %201 = vmatpush2.msra.mxu0 0.0
    %202 = vmatprep.subr.mxu0 0.0
    %203 = vmatpush2.msra.mxu0 0.0
    %204 = vmatprep.subr.mxu0 0.0
    %205 = vmatpush2.msra.mxu0 0.0
    %206 = vmatprep.subr.mxu0 0.0
    %207 = vmatpush2.msra.mxu0 0.0
    %208 = vmatprep.subr.mxu0 0.0
    %209 = vmatpush2.msra.mxu0 0.0
    %210 = vmatprep.subr.mxu0 0.0
    %211 = vmatpush2.msra.mxu0 0.0
    %212 = vmatprep.subr.mxu0 0.0
    %213 = vmatpush2.msra.mxu0 0.0
    %214 = vmatprep.subr.mxu0 0.0
    %215 = vmatpush2.msra.mxu0 0.0
    %216 = vmatprep.subr.mxu0 0.0
    %217 = vmatpush2.msra.mxu0 0.0
    %218 = vmatprep.subr.mxu0 0.0
    %219 = vmatpush2.msra.mxu0 0.0
    %220 = vmatprep.subr.mxu0 0.0
    %221 = vmatpush2.msra.mxu0 0.0
    %222 = vmatprep.subr.mxu0 0.0
    %223 = vmatpush2.msra.mxu0 0.0
    %224 = vmatprep.subr.mxu0 0.0
    %225 = vmatpush2.msra.mxu0 0.0
    %226 = vmatprep.mubr.f32.mxu0 0.0
    %227 = vmatmul.mubr.f32.gmra.mxu0 %v160
    %v228 = vpop.f32.mrf.mxu0
    %v229 = vadd.f32 %v157, %v228
    %v230 = vpop.f32.mrf.mxu0
    %231 = vdwg.mxu0
    %v232 = vmax.f32 %v229, 0.0
    %v233 = vld [vmem:[#allocation5] sm:$0xff]
    %v234 = vld [vmem:[#allocation5 + $0x8] sm:$0xff]
    %v235 = vld [vmem:[#allocation5 + $0x10] sm:$0xff]
    %v236 = vld [vmem:[#allocation5 + $0x18] sm:$0xff]
    %v237 = vld [vmem:[%s6] sm:$0x1]
    %v239 = vlaneseq
    %v240 = vshrl.u32 %v239, 7
    %v241 = vsub.s32 0, %v240
    %v242 = vrot.slane %v237, %v241
    %v245 = vsel %vm73, %v232, 0
    %247 = vmatprep.subr.mxu0 0.0
    %248 = vmatpush1.msra.mxu0 0.0
    %249 = vmatprep.subr.mxu0 0.0
    %250 = vmatpush1.msra.mxu0 0.0
    %251 = vmatprep.subr.mxu0 0.0
    %252 = vmatpush1.msra.mxu0 0.0
    %253 = vmatprep.subr.mxu0 0.0
    %254 = vmatpush1.msra.mxu0 0.0
    %255 = vmatprep.subr.mxu0 0.0
    %256 = vmatpush1.msra.mxu0 0.0
    %257 = vmatprep.subr.mxu0 0.0
    %258 = vmatpush1.msra.mxu0 0.0
    %259 = vmatprep.subr.mxu0 0.0
    %260 = vmatpush1.msra.mxu0 0.0
    %261 = vmatprep.subr.mxu0 0.0
    %262 = vmatpush1.msra.mxu0 0.0
    %263 = vmatprep.subr.mxu0 0.0
    %264 = vmatpush1.msra.mxu0 0.0
    %265 = vmatprep.subr.mxu0 0.0
    %266 = vmatpush1.msra.mxu0 0.0
    %267 = vmatprep.subr.mxu0 0.0
    %268 = vmatpush1.msra.mxu0 0.0
    %269 = vmatprep.subr.mxu0 0.0
    %270 = vmatpush1.msra.mxu0 0.0
    %271 = vmatprep.subr.mxu0 0.0
    %272 = vmatpush1.msra.mxu0 %v236
    %273 = vmatprep.subr.mxu0 0.0
    %274 = vmatpush1.msra.mxu0 %v235
    %275 = vmatprep.subr.mxu0 0.0
    %276 = vmatpush1.msra.mxu0 %v234
    %277 = vmatprep.subr.mxu0 0.0
    %278 = vmatpush1.msra.mxu0 %v233
    %279 = vmatprep.subr.mxu0 0.0
    %280 = vmatpush2.msra.mxu0 0.0
    %281 = vmatprep.subr.mxu0 0.0
    %282 = vmatpush2.msra.mxu0 0.0
    %283 = vmatprep.subr.mxu0 0.0
    %284 = vmatpush2.msra.mxu0 0.0
    %285 = vmatprep.subr.mxu0 0.0
    %286 = vmatpush2.msra.mxu0 0.0
    %287 = vmatprep.subr.mxu0 0.0
    %288 = vmatpush2.msra.mxu0 0.0
    %289 = vmatprep.subr.mxu0 0.0
    %290 = vmatpush2.msra.mxu0 0.0
    %291 = vmatprep.subr.mxu0 0.0
    %292 = vmatpush2.msra.mxu0 0.0
    %293 = vmatprep.subr.mxu0 0.0
    %294 = vmatpush2.msra.mxu0 0.0
    %295 = vmatprep.subr.mxu0 0.0
    %296 = vmatpush2.msra.mxu0 0.0
    %297 = vmatprep.subr.mxu0 0.0
    %298 = vmatpush2.msra.mxu0 0.0
    %299 = vmatprep.subr.mxu0 0.0
    %300 = vmatpush2.msra.mxu0 0.0
    %301 = vmatprep.subr.mxu0 0.0
    %302 = vmatpush2.msra.mxu0 0.0
    %303 = vmatprep.subr.mxu0 0.0
    %304 = vmatpush2.msra.mxu0 0.0
    %305 = vmatprep.subr.mxu0 0.0
    %306 = vmatpush2.msra.mxu0 0.0
    %307 = vmatprep.subr.mxu0 0.0
    %308 = vmatpush2.msra.mxu0 0.0
    %309 = vmatprep.subr.mxu0 0.0
    %310 = vmatpush2.msra.mxu0 0.0
    %311 = vmatprep.mubr.f32.mxu0 0.0
    %312 = vmatmul.mubr.f32.gmra.mxu0 %v245
    %v313 = vpop.f32.mrf.mxu0
    %v314 = vadd.f32 %v242, %v313
    %v315 = vpop.f32.mrf.mxu0
    %316 = vdwg.mxu0
    %v317 = vmax.f32 %v314, 0.0
    %v318 = vld [vmem:[%s7] sm:$0xff]
    %v319 = vld [vmem:[%s7 + $0x8] sm:$0xff]
    %v320 = vld [vmem:[%s7 + $0x10] sm:$0xff]
    %v321 = vld [vmem:[%s7 + $0x18] sm:$0xff]
    %v322 = vld [vmem:[%s8] sm:$0x1]
    %v324 = vlaneseq
    %v325 = vshrl.u32 %v324, 7
    %v326 = vsub.s32 0, %v325
    %v327 = vrot.slane %v322, %v326
    %v330 = vsel %vm73, %v317, 0
    %332 = vmatprep.subr.mxu0 0.0
    %333 = vmatpush1.msra.mxu0 0.0
    %334 = vmatprep.subr.mxu0 0.0
    %335 = vmatpush1.msra.mxu0 0.0
    %336 = vmatprep.subr.mxu0 0.0
    %337 = vmatpush1.msra.mxu0 0.0
    %338 = vmatprep.subr.mxu0 0.0
    %339 = vmatpush1.msra.mxu0 0.0
    %340 = vmatprep.subr.mxu0 0.0
    %341 = vmatpush1.msra.mxu0 0.0
    %342 = vmatprep.subr.mxu0 0.0
    %343 = vmatpush1.msra.mxu0 0.0
    %344 = vmatprep.subr.mxu0 0.0
    %345 = vmatpush1.msra.mxu0 0.0
    %346 = vmatprep.subr.mxu0 0.0
    %347 = vmatpush1.msra.mxu0 0.0
    %348 = vmatprep.subr.mxu0 0.0
    %349 = vmatpush1.msra.mxu0 0.0
    %350 = vmatprep.subr.mxu0 0.0
    %351 = vmatpush1.msra.mxu0 0.0
    %352 = vmatprep.subr.mxu0 0.0
    %353 = vmatpush1.msra.mxu0 0.0
    %354 = vmatprep.subr.mxu0 0.0
    %355 = vmatpush1.msra.mxu0 0.0
    %356 = vmatprep.subr.mxu0 0.0
    %357 = vmatpush1.msra.mxu0 %v321
    %358 = vmatprep.subr.mxu0 0.0
    %359 = vmatpush1.msra.mxu0 %v320
    %360 = vmatprep.subr.mxu0 0.0
    %361 = vmatpush1.msra.mxu0 %v319
    %362 = vmatprep.subr.mxu0 0.0
    %363 = vmatpush1.msra.mxu0 %v318
    %364 = vmatprep.subr.mxu0 0.0
    %365 = vmatpush2.msra.mxu0 0.0
    %366 = vmatprep.subr.mxu0 0.0
    %367 = vmatpush2.msra.mxu0 0.0
    %368 = vmatprep.subr.mxu0 0.0
    %369 = vmatpush2.msra.mxu0 0.0
    %370 = vmatprep.subr.mxu0 0.0
    %371 = vmatpush2.msra.mxu0 0.0
    %372 = vmatprep.subr.mxu0 0.0
    %373 = vmatpush2.msra.mxu0 0.0
    %374 = vmatprep.subr.mxu0 0.0
    %375 = vmatpush2.msra.mxu0 0.0
    %376 = vmatprep.subr.mxu0 0.0
    %377 = vmatpush2.msra.mxu0 0.0
    %378 = vmatprep.subr.mxu0 0.0
    %379 = vmatpush2.msra.mxu0 0.0
    %380 = vmatprep.subr.mxu0 0.0
    %381 = vmatpush2.msra.mxu0 0.0
    %382 = vmatprep.subr.mxu0 0.0
    %383 = vmatpush2.msra.mxu0 0.0
    %384 = vmatprep.subr.mxu0 0.0
    %385 = vmatpush2.msra.mxu0 0.0
    %386 = vmatprep.subr.mxu0 0.0
    %387 = vmatpush2.msra.mxu0 0.0
    %388 = vmatprep.subr.mxu0 0.0
    %389 = vmatpush2.msra.mxu0 0.0
    %390 = vmatprep.subr.mxu0 0.0
    %391 = vmatpush2.msra.mxu0 0.0
    %392 = vmatprep.subr.mxu0 0.0
    %393 = vmatpush2.msra.mxu0 0.0
    %394 = vmatprep.subr.mxu0 0.0
    %395 = vmatpush2.msra.mxu0 0.0
    %396 = vmatprep.mubr.f32.mxu0 0.0
    %397 = vmatmul.mubr.f32.gmra.mxu0 %v330
    %v398 = vpop.f32.mrf.mxu0
    %v399 = vadd.f32 %v327, %v398
    %v400 = vpop.f32.mrf.mxu0
    %401 = vdwg.mxu0
    %vm402 = vcmask 64512
    %403 = vst.msk [vmem:[#allocation7] sm:$0xff] %vm402, %v399
    // Predicated region
    $region46: #{tpu_custom_call.1} parent=1 // pred_check
      _
    $region47: #{tpu_custom_call.1} parent=1 // pred_check_branch
      %405 = sbr.rel (0) target = $region49
    $region48: #{tpu_custom_call.1} parent=1 // pred_region
      %s407 = ssub.s32 128, 128
      %408 = vsyncadd [#allocation4], %s407
      %s410 = sshll.u32 [#allocation7], 4
      %s411 = int_to_ptr.vmem [resolvable:$true] %s410
      %413 = dma.vmem_to_hbm [thread:$0]  %s411, 128, %s9, [#allocation4]
    $region49: #{tpu_custom_call.1} parent=1 // pred_fallthru
      _
    // Predicated region
    $region50: #{tpu_custom_call.1} parent=1 // pred_check
      _
    $region51: #{tpu_custom_call.1} parent=1 // pred_check_branch
      %415 = sbr.rel (0) target = $region53
    $region52: #{tpu_custom_call.1} parent=1 // pred_region
      %416 = dma.done [#allocation4], 128
    $region53: #{tpu_custom_call.1} parent=1 // pred_fallthru
      _
    %417 = vsyncpa [#allocation3], 1
    %418 = vsyncpa [#allocation6], 1
    %419 = vsyncpa [#allocation4], 1

</llo_original>
